<compile_context>
chip_gen: v6e
topology: v6e:2x2x1
jax: 0.10.0
libtpu: 0.0.40
codegen_flags: <defaults>
</compile_context>

<pallas_src>
import math
from functools import partial

import jax
import jax.numpy as jnp
from jax.experimental import pallas as pl
from jax.experimental.pallas import tpu as pltpu


def _round_up(x, m):
    return (x + m - 1) // m * m


def fm_model_kernel(
    flat_ref,   # (TB, F*E)  bf16   flattened embeddings for this batch tile
    lin_ref,    # (TB, 1)    f32    per-row linear term + lin_bias + output-layer bias (pre-folded)
    w1_ref,     # (F*E, H1)  bf16   BN1 folded in
    b1_ref,     # (1, H1)    f32    BN1 folded in
    w2_ref,     # (H1, H2)   bf16   BN2 folded in
    b2_ref,     # (1, H2)    f32    BN2 folded in
    wo_ref,     # (1, H2)    f32    output Linear weight as a row (used on the VPU)
    out_ref,    # (TB, 1)    f32
    *,
    num_fields,
    embed_dim,
):
    flat = flat_ref[...]                                   # (TB, F*E) bf16
    flat_f32 = flat.astype(jnp.float32)

    # ---- FactorizationMachine (reduce_sum=True), exact f32 math ----
    # sum over fields: F static lane slices of width E (unrolled)
    sum_f = flat_f32[:, 0:embed_dim]                       # (TB, E)
    for f in range(1, num_fields):
        sum_f = sum_f + flat_f32[:, f * embed_dim:(f + 1) * embed_dim]
    # sum_e (sum_f x)^2  and  sum_{f,e} x^2  — two lane reductions (XLU), one VPU square each
    sq_of_sum = jnp.sum(sum_f * sum_f, axis=-1, keepdims=True)         # (TB, 1)
    sum_of_sq = jnp.sum(flat_f32 * flat_f32, axis=-1, keepdims=True)   # (TB, 1)
    fm = 0.5 * (sq_of_sum - sum_of_sq)                                 # (TB, 1)

    # ---- MLP: Linear -> BN(eval, folded) -> ReLU -> [Dropout=id] -> ... -> Linear(1) ----
    h1 = jnp.dot(flat, w1_ref[...], preferred_element_type=jnp.float32) + b1_ref[...]
    h1 = jnp.maximum(h1, 0.0)                              # (TB, H1) f32

    h2 = jnp.dot(h1.astype(w2_ref.dtype), w2_ref[...],
                 preferred_element_type=jnp.float32) + b2_ref[...]
    h2 = jnp.maximum(h2, 0.0)                              # (TB, H2) f32

    # output Linear (N=1): VPU multiply + lane reduction instead of a 1-column MXU matmul
    mlp_out = jnp.sum(h2 * wo_ref[...], axis=-1, keepdims=True)        # (TB, 1)

    # ---- fuse (linear term + biases already folded into lin_ref) + final relu ----
    out_ref[...] = jnp.maximum(lin_ref[...] + fm + mlp_out, 0.0)


def fm_model_forward(x_idx, params, block_b=4096):
    """x_idx: int32 (B, F) categorical indices per field. Returns (B,) float32."""
    B, F = x_idx.shape
    E = params["emb_table"].shape[1]
    FE = F * E
    H1 = params["w1"].shape[1]
    H2 = params["w2"].shape[1]

    idx = x_idx + params["offsets"][None, :]                               # (B, F)

    # glue: embedding gathers (data-dependent indexing stays in XLA)
    embed_flat = jnp.take(params["emb_table"], idx, axis=0).reshape(B, FE)  # (B, F*E) bf16

    # linear term; fold the FeaturesLinear bias AND the MLP output-layer bias per row
    lin = (jnp.sum(jnp.take(params["lin_w"], idx, axis=0), axis=1, keepdims=True)
           + params["lin_bias"] + params["bo"]).astype(jnp.float32)         # (B, 1)

    # batch tiling (sublane-aligned); keep the double-buffered activation tile under ~4 MiB
    max_tb_vmem = max(8, ((4 * 1024 * 1024) // (FE * 2)) // 8 * 8)
    TB = min(block_b, max_tb_vmem, _round_up(B, 8))
    B_pad = _round_up(B, TB)
    if B_pad != B:
        pad = B_pad - B
        embed_flat = jnp.pad(embed_flat, ((0, pad), (0, 0)))
        lin = jnp.pad(lin, ((0, pad), (0, 0)))
    grid = (B_pad // TB,)

    kernel = partial(fm_model_kernel, num_fields=F, embed_dim=E)

    out = pl.pallas_call(
        kernel,
        out_shape=jax.ShapeDtypeStruct((B_pad, 1), jnp.float32),
        grid=grid,
        in_specs=[
            pl.BlockSpec((TB, FE), lambda i: (i, 0)),     # flat embeddings: batch tiled
            pl.BlockSpec((TB, 1), lambda i: (i, 0)),      # folded linear term: batch tiled
            pl.BlockSpec((FE, H1), lambda i: (0, 0)),     # weights: VMEM-resident across steps
            pl.BlockSpec((1, H1), lambda i: (0, 0)),
            pl.BlockSpec((H1, H2), lambda i: (0, 0)),
            pl.BlockSpec((1, H2), lambda i: (0, 0)),
            pl.BlockSpec((1, H2), lambda i: (0, 0)),
        ],
        out_specs=pl.BlockSpec((TB, 1), lambda i: (i, 0)),
        compiler_params=pltpu.CompilerParams(
            dimension_semantics=("parallel",),            # shard batch tiles across TCs (v7x)
        ),
    )(embed_flat, lin, params["w1"], params["b1"],
      params["w2"], params["b2"], params["wo_row"])

    return out[:B, 0]


def reference_forward(x_idx, params):
    """Pure-JAX reference mirroring the PyTorch module (eval mode), on the same stored params."""
    B, F = x_idx.shape
    E = params["emb_table"].shape[1]
    idx = x_idx + params["offsets"][None, :]

    embed = jnp.take(params["emb_table"], idx, axis=0).astype(jnp.float32)   # (B, F, E)
    square_of_sum = jnp.sum(embed, axis=1) ** 2
    sum_of_square = jnp.sum(embed ** 2, axis=1)
    fm = 0.5 * jnp.sum(square_of_sum - sum_of_square, axis=-1, keepdims=True)

    lin = (jnp.sum(jnp.take(params["lin_w"], idx, axis=0), axis=1, keepdims=True)
           + params["lin_bias"])

    flat = embed.reshape(B, F * E)
    h1 = jnp.maximum(flat @ params["w1"].astype(jnp.float32) + params["b1"], 0.0)
    h1 = h1.astype(jnp.bfloat16).astype(jnp.float32)       # mirror the kernel's bf16 second matmul input
    h2 = jnp.maximum(h1 @ params["w2"].astype(jnp.float32) + params["b2"], 0.0)
    mlp_out = jnp.sum(h2 * params["wo_row"], axis=-1, keepdims=True) + params["bo"]

    return jnp.maximum(lin + fm + mlp_out, 0.0)[:, 0]


def init_params(key, field_dims, embed_dim, mlp_dims):
    """Torch-style init, with eval-mode BatchNorm folded into the Linear layers and bf16 storage."""
    V = sum(field_dims)
    F = len(field_dims)
    offsets = jnp.array([0] + list(jnp.cumsum(jnp.array(field_dims))[:-1]), dtype=jnp.int32)

    keys = jax.random.split(key, 8)

    # FeaturesEmbedding: xavier_uniform_
    bound_e = math.sqrt(6.0 / (V + embed_dim))
    emb_table = jax.random.uniform(keys[0], (V, embed_dim), jnp.float32, -bound_e, bound_e)

    # FeaturesLinear: nn.Embedding default init ~ N(0,1), bias zeros
    lin_w = jax.random.normal(keys[1], (V,), jnp.float32)
    lin_bias = jnp.zeros((), jnp.float32)

    # MLP Linear default init: U(-1/sqrt(fan_in), 1/sqrt(fan_in))
    def linear_init(k, fan_in, fan_out):
        kw, kb = jax.random.split(k)
        bound = 1.0 / math.sqrt(fan_in)
        w = jax.random.uniform(kw, (fan_in, fan_out), jnp.float32, -bound, bound)
        b = jax.random.uniform(kb, (1, fan_out), jnp.float32, -bound, bound)
        return w, b

    in_dim = F * embed_dim
    h1, h2 = mlp_dims
    w1, b1 = linear_init(keys[2], in_dim, h1)
    w2, b2 = linear_init(keys[3], h1, h2)
    wo, bo = linear_init(keys[4], h2, 1)

    # BatchNorm1d eval mode with fresh params: gamma=1, beta=0, running_mean=0, running_var=1
    eps = 1e-5
    s1 = jnp.full((1, h1), 1.0 / math.sqrt(1.0 + eps), jnp.float32)
    t1 = jnp.zeros((1, h1), jnp.float32)
    s2 = jnp.full((1, h2), 1.0 / math.sqrt(1.0 + eps), jnp.float32)
    t2 = jnp.zeros((1, h2), jnp.float32)

    # Fold BN into the Linear layers (one-time, host-side), store hot weights in bf16.
    w1f = (w1 * s1).astype(jnp.bfloat16)
    b1f = b1 * s1 + t1
    w2f = (w2 * s2).astype(jnp.bfloat16)
    b2f = b2 * s2 + t2

    return dict(
        offsets=offsets,
        emb_table=emb_table.astype(jnp.bfloat16),
        lin_w=lin_w,
        lin_bias=lin_bias,
        w1=w1f, b1=b1f,
        w2=w2f, b2=b2f,
        wo_row=wo.reshape(1, h2).astype(jnp.float32),
        bo=bo[0, 0],
    )


if __name__ == "__main__":
    field_dims = [3, 4, 5]      # vocab sizes per field -> V = 12
    embed_dim = 16
    mlp_dims = (32, 16)
    batch = 8
    num_fields = len(field_dims)

    key = jax.random.PRNGKey(0)
    kp, kx = jax.random.split(key)
    params = init_params(kp, field_dims, embed_dim, mlp_dims)

    # deterministic categorical inputs, each field index within its own vocab
    maxs = jnp.array(field_dims, dtype=jnp.int32)[None, :]
    x_idx = (jax.random.randint(kx, (batch, num_fields), 0, 10_000, dtype=jnp.int32) % maxs).astype(jnp.int32)

    out = jax.jit(fm_model_forward)(x_idx, params)
    out = jax.block_until_ready(out)

    ref = reference_forward(x_idx, params)
    assert out.shape == (batch,)
    assert jnp.allclose(out, ref, atol=1e-4, rtol=1e-4), (out, ref)

    print("KERNEL_OK")
</pallas_src>

<mosaic_0001>
module attributes {stable_mosaic.version = 11 : i64} {
  func.func @fm_model_kernel(%arg0: i32, %arg1: memref<8x48xbf16, #tpu.memory_space<vmem>>, %arg2: memref<8x1xf32, #tpu.memory_space<vmem>>, %arg3: memref<48x32xbf16, #tpu.memory_space<vmem>>, %arg4: memref<1x32xf32, #tpu.memory_space<vmem>>, %arg5: memref<32x16xbf16, #tpu.memory_space<vmem>>, %arg6: memref<1x16xf32, #tpu.memory_space<vmem>>, %arg7: memref<1x16xf32, #tpu.memory_space<vmem>>, %arg8: memref<8x1xf32, #tpu.memory_space<vmem>>) attributes {dimension_semantics = [#tpu.dimension_semantics<parallel>], iteration_bounds = array<i64: 1>, scalar_prefetch = 0 : i64, scratch_operands = 0 : i64, tpu.core_type = #tpu.core_type<tc>, window_params = [{transform_indices = @transform_0, window_bounds = array<i64: 8, 48>}, {transform_indices = @transform_1, window_bounds = array<i64: 8, 1>}, {pipeline_mode = #tpu.pipeline_mode<synchronous>, transform_indices = @transform_2, window_bounds = array<i64: 48, 32>}, {pipeline_mode = #tpu.pipeline_mode<synchronous>, transform_indices = @transform_3, window_bounds = array<i64: 1, 32>}, {pipeline_mode = #tpu.pipeline_mode<synchronous>, transform_indices = @transform_4, window_bounds = array<i64: 32, 16>}, {pipeline_mode = #tpu.pipeline_mode<synchronous>, transform_indices = @transform_5, window_bounds = array<i64: 1, 16>}, {pipeline_mode = #tpu.pipeline_mode<synchronous>, transform_indices = @transform_6, window_bounds = array<i64: 1, 16>}, {transform_indices = @transform_7, window_bounds = array<i64: 8, 1>}]} {
    %c0 = arith.constant 0 : index
    %c0_0 = arith.constant 0 : index
    %0 = vector.load %arg1[%c0, %c0_0] : memref<8x48xbf16, #tpu.memory_space<vmem>>, vector<8x48xbf16>
    %1 = arith.extf %0 : vector<8x48xbf16> to vector<8x48xf32>
    %2 = vector.extract_strided_slice %1 {offsets = [0, 0], sizes = [8, 16], strides = [1, 1]} : vector<8x48xf32> to vector<8x16xf32>
    %3 = vector.extract_strided_slice %1 {offsets = [0, 16], sizes = [8, 16], strides = [1, 1]} : vector<8x48xf32> to vector<8x16xf32>
    %4 = arith.addf %2, %3 : vector<8x16xf32>
    %5 = vector.extract_strided_slice %1 {offsets = [0, 32], sizes = [8, 16], strides = [1, 1]} : vector<8x48xf32> to vector<8x16xf32>
    %6 = arith.addf %4, %5 : vector<8x16xf32>
    %7 = arith.mulf %6, %6 : vector<8x16xf32>
    %cst = arith.constant dense<0.000000e+00> : vector<8xf32>
    %8 = vector.multi_reduction <add>, %7, %cst [1] : vector<8x16xf32> to vector<8xf32>
    %9 = vector.shape_cast %8 : vector<8xf32> to vector<8x1xf32>
    %10 = arith.mulf %1, %1 : vector<8x48xf32>
    %cst_1 = arith.constant dense<0.000000e+00> : vector<8xf32>
    %11 = vector.multi_reduction <add>, %10, %cst_1 [1] : vector<8x48xf32> to vector<8xf32>
    %12 = vector.shape_cast %11 : vector<8xf32> to vector<8x1xf32>
    %13 = arith.subf %9, %12 : vector<8x1xf32>
    %cst_2 = arith.constant 5.000000e-01 : f32
    %14 = vector.broadcast %cst_2 : f32 to vector<8x1xf32>
    %15 = arith.mulf %14, %13 : vector<8x1xf32>
    %c0_3 = arith.constant 0 : index
    %c0_4 = arith.constant 0 : index
    %16 = vector.load %arg3[%c0_3, %c0_4] : memref<48x32xbf16, #tpu.memory_space<vmem>>, vector<48x32xbf16>
    %cst_5 = arith.constant dense<0.000000e+00> : vector<8x32xf32>
    %17 = tpu.matmul %0, %16, %cst_5 {dimension_numbers = #tpu.dot_dimension_numbers<[1], [0], [0], [1], [0, 0, 1, 1], [], []>} : vector<8x48xbf16>, vector<48x32xbf16>, vector<8x32xf32> -> vector<8x32xf32>
    %c0_6 = arith.constant 0 : index
    %c0_7 = arith.constant 0 : index
    %18 = vector.load %arg4[%c0_6, %c0_7] : memref<1x32xf32, #tpu.memory_space<vmem>>, vector<1x32xf32>
    %19 = vector.broadcast %18 : vector<1x32xf32> to vector<8x32xf32>
    %20 = arith.addf %17, %19 : vector<8x32xf32>
    %cst_8 = arith.constant 0.000000e+00 : f32
    %21 = vector.broadcast %cst_8 : f32 to vector<8x32xf32>
    %22 = arith.maximumf %20, %21 : vector<8x32xf32>
    %23 = arith.truncf %22 : vector<8x32xf32> to vector<8x32xbf16>
    %c0_9 = arith.constant 0 : index
    %c0_10 = arith.constant 0 : index
    %24 = vector.load %arg5[%c0_9, %c0_10] : memref<32x16xbf16, #tpu.memory_space<vmem>>, vector<32x16xbf16>
    %cst_11 = arith.constant dense<0.000000e+00> : vector<8x16xf32>
    %25 = tpu.matmul %23, %24, %cst_11 {dimension_numbers = #tpu.dot_dimension_numbers<[1], [0], [0], [1], [0, 0, 1, 1], [], []>} : vector<8x32xbf16>, vector<32x16xbf16>, vector<8x16xf32> -> vector<8x16xf32>
    %c0_12 = arith.constant 0 : index
    %c0_13 = arith.constant 0 : index
    %26 = vector.load %arg6[%c0_12, %c0_13] : memref<1x16xf32, #tpu.memory_space<vmem>>, vector<1x16xf32>
    %27 = vector.broadcast %26 : vector<1x16xf32> to vector<8x16xf32>
    %28 = arith.addf %25, %27 : vector<8x16xf32>
    %cst_14 = arith.constant 0.000000e+00 : f32
    %29 = vector.broadcast %cst_14 : f32 to vector<8x16xf32>
    %30 = arith.maximumf %28, %29 : vector<8x16xf32>
    %c0_15 = arith.constant 0 : index
    %c0_16 = arith.constant 0 : index
    %31 = vector.load %arg7[%c0_15, %c0_16] : memref<1x16xf32, #tpu.memory_space<vmem>>, vector<1x16xf32>
    %32 = vector.broadcast %31 : vector<1x16xf32> to vector<8x16xf32>
    %33 = arith.mulf %30, %32 : vector<8x16xf32>
    %cst_17 = arith.constant dense<0.000000e+00> : vector<8xf32>
    %34 = vector.multi_reduction <add>, %33, %cst_17 [1] : vector<8x16xf32> to vector<8xf32>
    %35 = vector.shape_cast %34 : vector<8xf32> to vector<8x1xf32>
    %c0_18 = arith.constant 0 : index
    %c0_19 = arith.constant 0 : index
    %36 = vector.load %arg2[%c0_18, %c0_19] : memref<8x1xf32, #tpu.memory_space<vmem>>, vector<8x1xf32>
    %37 = arith.addf %36, %15 : vector<8x1xf32>
    %38 = arith.addf %37, %35 : vector<8x1xf32>
    %cst_20 = arith.constant 0.000000e+00 : f32
    %39 = vector.broadcast %cst_20 : f32 to vector<8x1xf32>
    %40 = arith.maximumf %38, %39 : vector<8x1xf32>
    %c0_21 = arith.constant 0 : index
    %c0_22 = arith.constant 0 : index
    %41 = vector.load %arg8[%c0_21, %c0_22] : memref<8x1xf32, #tpu.memory_space<vmem>>, vector<8x1xf32>
    tpu.vector_store %arg8[%c0_21, %c0_22], %40 {strides = array<i32>} : memref<8x1xf32, #tpu.memory_space<vmem>>, vector<8x1xf32>,
    return
  }
  func.func @transform_0(%arg0: i32) -> (i32, i32) {
    %c0_i32 = arith.constant 0 : i32
    %c0_i32_0 = arith.constant 0 : i32
    return %arg0, %c0_i32 : i32, i32
  }
  func.func @transform_1(%arg0: i32) -> (i32, i32) {
    %c0_i32 = arith.constant 0 : i32
    %c0_i32_0 = arith.constant 0 : i32
    return %arg0, %c0_i32 : i32, i32
  }
  func.func @transform_2(%arg0: i32) -> (i32, i32) {
    %c0_i32 = arith.constant 0 : i32
    %c0_i32_0 = arith.constant 0 : i32
    %c0_i32_1 = arith.constant 0 : i32
    return %c0_i32, %c0_i32_0 : i32, i32
  }
  func.func @transform_3(%arg0: i32) -> (i32, i32) {
    %c0_i32 = arith.constant 0 : i32
    %c0_i32_0 = arith.constant 0 : i32
    %c0_i32_1 = arith.constant 0 : i32
    return %c0_i32, %c0_i32_0 : i32, i32
  }
  func.func @transform_4(%arg0: i32) -> (i32, i32) {
    %c0_i32 = arith.constant 0 : i32
    %c0_i32_0 = arith.constant 0 : i32
    %c0_i32_1 = arith.constant 0 : i32
    return %c0_i32, %c0_i32_0 : i32, i32
  }
  func.func @transform_5(%arg0: i32) -> (i32, i32) {
    %c0_i32 = arith.constant 0 : i32
    %c0_i32_0 = arith.constant 0 : i32
    %c0_i32_1 = arith.constant 0 : i32
    return %c0_i32, %c0_i32_0 : i32, i32
  }
  func.func @transform_6(%arg0: i32) -> (i32, i32) {
    %c0_i32 = arith.constant 0 : i32
    %c0_i32_0 = arith.constant 0 : i32
    %c0_i32_1 = arith.constant 0 : i32
    return %c0_i32, %c0_i32_0 : i32, i32
  }
  func.func @transform_7(%arg0: i32) -> (i32, i32) {
    %c0_i32 = arith.constant 0 : i32
    %c0_i32_0 = arith.constant 0 : i32
    return %arg0, %c0_i32 : i32, i32
  }
}

</mosaic_0001>

<llo_original>
// kernel: fm_model_forward.1
$region0: #{fm_model_forward.1}
  #allocation0 [shape = 'u32[]', space=smem, size = 0x4, offset = 0x4, fixed_abs, tag = 'smem constant byte address 0x4 - core index']
  #allocation1 [shape = 'u32[144,128]{1,0:T(1,128)}', space=vmem, size = 0x12000, scoped, tag = 'internal scratch']
  %s0 = inlined_call_operand.vmem [shape: bf16[8,48], index: 0, kind: input, shape index: {}]
  %s1 = inlined_call_operand.vmem [shape: f32[8,1], index: 1, kind: input, shape index: {}]
  %s2 = inlined_call_operand.vmem [shape: bf16[48,32], index: 2, kind: input, shape index: {}]
  %s3 = inlined_call_operand.vmem [shape: f32[1,32], index: 3, kind: input, shape index: {}]
  %s4 = inlined_call_operand.vmem [shape: bf16[32,16], index: 4, kind: input, shape index: {}]
  %s5 = inlined_call_operand.vmem [shape: f32[1,16], index: 5, kind: input, shape index: {}]
  %s6 = inlined_call_operand.vmem [shape: f32[1,16], index: 6, kind: input, shape index: {}]
  %s7 = inlined_call_operand.vmem [shape: f32[8,1], index: 7, kind: output, shape index: {}]
  %s8 = sld [smem:[#allocation0]]
  $region38: #{fm_model_forward.1} parent=0
    _
  %s10 = ssub.s32 1, %s8
  %s11 = scalar_select 0, %s10, %s8
  // Predicated region
  $region2: #{fm_model_forward.1} parent=0 // pred_check
    _
  $region3: #{fm_model_forward.1} parent=0 // pred_check_branch
    %13 = sbr.rel (0) target = $region5
  $region4: #{fm_model_forward.1} parent=0 // pred_region
    _
  $region5: #{fm_model_forward.1} parent=0 // pred_fallthru
    _
  // Predicated region
  $region6: #{fm_model_forward.1} parent=0 // pred_check
    _
  $region7: #{fm_model_forward.1} parent=0 // pred_check_branch
    %15 = sbr.rel (0) target = $region9
  $region8: #{fm_model_forward.1} parent=0 // pred_region
    _
  $region9: #{fm_model_forward.1} parent=0 // pred_fallthru
    _
  // Predicated region
  $region10: #{fm_model_forward.1} parent=0 // pred_check
    _
  $region11: #{fm_model_forward.1} parent=0 // pred_check_branch
    %17 = sbr.rel (0) target = $region13
  $region12: #{fm_model_forward.1} parent=0 // pred_region
    _
  $region13: #{fm_model_forward.1} parent=0 // pred_fallthru
    _
  // Predicated region
  $region14: #{fm_model_forward.1} parent=0 // pred_check
    _
  $region15: #{fm_model_forward.1} parent=0 // pred_check_branch
    %19 = sbr.rel (0) target = $region17
  $region16: #{fm_model_forward.1} parent=0 // pred_region
    _
  $region17: #{fm_model_forward.1} parent=0 // pred_fallthru
    _
  // Predicated region
  $region18: #{fm_model_forward.1} parent=0 // pred_check
    _
  $region19: #{fm_model_forward.1} parent=0 // pred_check_branch
    %21 = sbr.rel (0) target = $region21
  $region20: #{fm_model_forward.1} parent=0 // pred_region
    _
  $region21: #{fm_model_forward.1} parent=0 // pred_fallthru
    _
  // Predicated region
  $region22: #{fm_model_forward.1} parent=0 // pred_check
    _
  $region23: #{fm_model_forward.1} parent=0 // pred_check_branch
    %23 = sbr.rel (0) target = $region25
  $region24: #{fm_model_forward.1} parent=0 // pred_region
    _
  $region25: #{fm_model_forward.1} parent=0 // pred_fallthru
    _
  // Predicated region
  $region26: #{fm_model_forward.1} parent=0 // pred_check
    _
  $region27: #{fm_model_forward.1} parent=0 // pred_check_branch
    %25 = sbr.rel (0) target = $region29
  $region28: #{fm_model_forward.1} parent=0 // pred_region
    _
  $region29: #{fm_model_forward.1} parent=0 // pred_fallthru
    _
  %v27 = vld [vmem:[%s0] sm:$0xf]
  %v28 = vunpack.c.l.bf16 %v27
  %30 = vrot.lane.b32.xlu0 %v28, 112
  %v31 = vpop.permute.xlu0 %30
  %v33 = vadd.f32 %v28, %v31
  %34 = vrot.lane.b32.xlu0 %v28, 96
  %v35 = vpop.permute.xlu0 %34
  %v37 = vadd.f32 %v33, %v35
  %v38 = vmul.f32 %v37, %v37
  %vm39 = vcmask 130048
  %v40 = vsel %vm39, %v38, 0.0
  %41 = vadd.xlane.f32.xlu0 %v40
  %v42 = vpop.xlane.xlu0 %41
  %v43 = vmul.f32 %v28, %v28
  %vm44 = vcmask 392192
  %v45 = vsel %vm44, %v43, 0.0
  %46 = vadd.xlane.f32.xlu0 %v45
  %v47 = vpop.xlane.xlu0 %46
  %v48 = vsub.f32 %v42, %v47
  %v49 = vmul.f32 %v48, 0.5
  %v50 = vld [vmem:[%s2] sm:$0xf]
  %v51 = vld [vmem:[%s2 + $0x4] sm:$0xf]
  %v52 = vld [vmem:[%s2 + $0x8] sm:$0xf]
  %v53 = vld [vmem:[%s2 + $0xc] sm:$0xf]
  %v54 = vld [vmem:[%s2 + $0x10] sm:$0xf]
  %v55 = vld [vmem:[%s2 + $0x14] sm:$0xf]
  %v56 = vld [vmem:[%s3] sm:$0x1]
  %v58 = vlaneseq
  %v59 = vshrl.u32 %v58, 7
  %v60 = vsub.s32 0, %v59
  %v61 = vrot.slane %v56, %v60
  %v69 = vunpack.c.l.b16 %v50
  %v70 = vunpack.c.l.b16 %v51
  %v71 = vunpack.c.l.b16 %v52
  %v72 = vunpack.c.l.b16 %v53
  %v73 = vunpack.c.l.b16 %v54
  %v74 = vunpack.c.l.b16 %v55
  %v75 = vpack.c.b16 %v70, %v69
  %v76 = vpack.c.b16 %v72, %v71
  %v77 = vpack.c.b16 %v74, %v73
  %v82 = vsel %vm44, %v27, 0
  %84 = vmatprep.subr.bf16.mxu0 0
  %85 = vmatpush1.bf16.msra.mxu0 0
  %86 = vmatprep.subr.bf16.mxu0 0
  %87 = vmatpush1.bf16.msra.mxu0 0
  %88 = vmatprep.subr.bf16.mxu0 0
  %89 = vmatpush1.bf16.msra.mxu0 0
  %90 = vmatprep.subr.bf16.mxu0 0
  %91 = vmatpush1.bf16.msra.mxu0 0
  %92 = vmatprep.subr.bf16.mxu0 0
  %93 = vmatpush1.bf16.msra.mxu0 0
  %94 = vmatprep.subr.bf16.mxu0 0
  %95 = vmatpush1.bf16.msra.mxu0 %v77
  %96 = vmatprep.subr.bf16.mxu0 0
  %97 = vmatpush1.bf16.msra.mxu0 %v76
  %98 = vmatprep.subr.bf16.mxu0 0
  %99 = vmatpush1.bf16.msra.mxu0 %v75
  %100 = vmatprep.subr.bf16.mxu0 0
  %101 = vmatpush2.bf16.msra.mxu0 0
  %102 = vmatprep.subr.bf16.mxu0 0
  %103 = vmatpush2.bf16.msra.mxu0 0
  %104 = vmatprep.subr.bf16.mxu0 0
  %105 = vmatpush2.bf16.msra.mxu0 0
  %106 = vmatprep.subr.bf16.mxu0 0
  %107 = vmatpush2.bf16.msra.mxu0 0
  %108 = vmatprep.subr.bf16.mxu0 0
  %109 = vmatpush2.bf16.msra.mxu0 0
  %110 = vmatprep.subr.bf16.mxu0 0
  %111 = vmatpush2.bf16.msra.mxu0 0
  %112 = vmatprep.subr.bf16.mxu0 0
  %113 = vmatpush2.bf16.msra.mxu0 0
  %114 = vmatprep.subr.bf16.mxu0 0
  %115 = vmatpush2.bf16.msra.mxu0 0
  %116 = vmatprep.mubr.bf16.mxu0 0
  %117 = vmatmul.mubr.bf16.gmra.mxu0 %v82
  %v118 = vpop.f32.mrf.mxu0
  %v119 = vadd.f32 %v61, %v118
  %v120 = vpop.f32.mrf.mxu0
  %v121 = vpop.f32.mrf.mxu0
  %v122 = vpop.f32.mrf.mxu0
  %123 = vdwg.mxu0
  %v124 = vmax.f32 %v119, 0.0
  %v125 = vpack.c.bf16 %v124, %v124
  %v126 = vld [vmem:[%s4] sm:$0xf]
  %v127 = vld [vmem:[%s4 + $0x4] sm:$0xf]
  %v128 = vld [vmem:[%s4 + $0x8] sm:$0xf]
  %v129 = vld [vmem:[%s4 + $0xc] sm:$0xf]
  %v130 = vld [vmem:[%s5] sm:$0x1]
  %v132 = vlaneseq
  %v133 = vshrl.u32 %v132, 7
  %v134 = vsub.s32 0, %v133
  %v135 = vrot.slane %v130, %v134
  %v141 = vunpack.c.l.b16 %v126
  %v142 = vunpack.c.l.b16 %v127
  %v143 = vunpack.c.l.b16 %v128
  %v144 = vunpack.c.l.b16 %v129
  %v145 = vpack.c.b16 %v142, %v141
  %v146 = vpack.c.b16 %v144, %v143
  %vm149 = vcmask 261120
  %v151 = vsel %vm149, %v125, 0
  %153 = vmatprep.subr.bf16.mxu0 0
  %154 = vmatpush1.bf16.msra.mxu0 0
  %155 = vmatprep.subr.bf16.mxu0 0
  %156 = vmatpush1.bf16.msra.mxu0 0
  %157 = vmatprep.subr.bf16.mxu0 0
  %158 = vmatpush1.bf16.msra.mxu0 0
  %159 = vmatprep.subr.bf16.mxu0 0
  %160 = vmatpush1.bf16.msra.mxu0 0
  %161 = vmatprep.subr.bf16.mxu0 0
  %162 = vmatpush1.bf16.msra.mxu0 0
  %163 = vmatprep.subr.bf16.mxu0 0
  %164 = vmatpush1.bf16.msra.mxu0 0
  %165 = vmatprep.subr.bf16.mxu0 0
  %166 = vmatpush1.bf16.msra.mxu0 %v146
  %167 = vmatprep.subr.bf16.mxu0 0
  %168 = vmatpush1.bf16.msra.mxu0 %v145
  %169 = vmatprep.subr.bf16.mxu0 0
  %170 = vmatpush2.bf16.msra.mxu0 0
  %171 = vmatprep.subr.bf16.mxu0 0
  %172 = vmatpush2.bf16.msra.mxu0 0
  %173 = vmatprep.subr.bf16.mxu0 0
  %174 = vmatpush2.bf16.msra.mxu0 0
  %175 = vmatprep.subr.bf16.mxu0 0
  %176 = vmatpush2.bf16.msra.mxu0 0
  %177 = vmatprep.subr.bf16.mxu0 0
  %178 = vmatpush2.bf16.msra.mxu0 0
  %179 = vmatprep.subr.bf16.mxu0 0
  %180 = vmatpush2.bf16.msra.mxu0 0
  %181 = vmatprep.subr.bf16.mxu0 0
  %182 = vmatpush2.bf16.msra.mxu0 0
  %183 = vmatprep.subr.bf16.mxu0 0
  %184 = vmatpush2.bf16.msra.mxu0 0
  %185 = vmatprep.mubr.bf16.mxu0 0
  %186 = vmatmul.mubr.bf16.gmra.mxu0 %v151
  %v187 = vpop.f32.mrf.mxu0
  %v188 = vadd.f32 %v135, %v187
  %v189 = vpop.f32.mrf.mxu0
  %v190 = vpop.f32.mrf.mxu0
  %v191 = vpop.f32.mrf.mxu0
  %192 = vdwg.mxu0
  %v193 = vmax.f32 %v188, 0.0
  %v194 = vld [vmem:[%s6] sm:$0x1]
  %v196 = vlaneseq
  %v197 = vshrl.u32 %v196, 7
  %v198 = vsub.s32 0, %v197
  %v199 = vrot.slane %v194, %v198
  %v201 = vmul.f32 %v193, %v199
  %v202 = vsel %vm39, %v201, 0.0
  %203 = vadd.xlane.f32.xlu0 %v202
  %v204 = vpop.xlane.xlu0 %203
  %v205 = vld [vmem:[%s1] sm:$0xff]
  %v206 = vadd.f32 %v205, %v49
  %v207 = vadd.f32 %v206, %v204
  %v208 = vmax.f32 %v207, 0.0
  %vm209 = vcmask 7168
  %210 = vst.msk [vmem:[%s7] sm:$0xff] %vm209, %v208
  // Predicated region
  $region30: #{fm_model_forward.1} parent=0 // pred_check
    _
  $region31: #{fm_model_forward.1} parent=0 // pred_check_branch
    %212 = sbr.rel (0) target = $region33
  $region32: #{fm_model_forward.1} parent=0 // pred_region
    _
  $region33: #{fm_model_forward.1} parent=0 // pred_fallthru
    _
  // Predicated region
  $region34: #{fm_model_forward.1} parent=0 // pred_check
    _
  $region35: #{fm_model_forward.1} parent=0 // pred_check_branch
    %214 = sbr.rel (0) target = $region37
  $region36: #{fm_model_forward.1} parent=0 // pred_region
    _
  $region37: #{fm_model_forward.1} parent=0 // pred_fallthru
    _

</llo_original>
